<compile_context>
chip_gen: v5e
topology: v5e:2x2
jax: 0.10.0
libtpu: 0.0.40
codegen_flags: <defaults>
</compile_context>

<pallas_src>
import jax
import jax.numpy as jnp
from jax.experimental import pallas as pl
from jax.experimental.pallas import tpu as pltpu


# ---------------------------------------------------------------------------
# Fused kernel (one time block per grid step):
#   onehot = (ids == iota_V)                     (VPU)
#   h      = onehot @ projtab                    (MXU, bf16 in / f32 acc)
#   pad    = bf16(h)                             (full unmasked block store)
#   acc   += sel @ h                             (MXU selection pool, f32)
#   fs     = acc @ Wt        (last step only)    (MXU, f32)
# ---------------------------------------------------------------------------
def encoder_fused_kernel(ids_ref, sel_ref, projtab_ref, wt_ref,
                         pad_ref, fs_ref, acc_ref):
    # ids_ref:     (1, Tt*B, 1) int32   token ids of this time block (time-major)
    # sel_ref:     (B, Tt*B)    f32     0/1 selection matrix, sel[b, t*B+b] = 1
    # projtab_ref: (V, H)       bf16    embed @ wp (padding row exactly zero)
    # wt_ref:      (H, L*H)     f32     transform weight (nn.Linear weight.T)
    # pad_ref:     (1, Tt*B, H) bf16    this block of the time-padded internal
    # fs_ref:      (B, L*H)     f32     raw (un-scaled, un-biased) transform out
    # acc_ref:     (B, H)       f32     persistent pool accumulator (scratch)
    k = pl.program_id(0)

    @pl.when(k == 0)
    def _():
        acc_ref[...] = jnp.zeros_like(acc_ref)

    # Fused embedding gather + projection as a one-hot matmul on the MXU.
    ids = ids_ref[0]                                              # (Tt*B, 1) int32
    n_rows = ids.shape[0]
    v = projtab_ref.shape[0]
    iota_v = jax.lax.broadcasted_iota(jnp.int32, (n_rows, v), 1)
    onehot = (ids == iota_v).astype(jnp.bfloat16)                 # (Tt*B, V)
    h = jnp.dot(onehot, projtab_ref[...],
                preferred_element_type=jnp.float32)               # (Tt*B, H) f32

    # Largest HBM write: emit in bf16 (lossless here — h rows are bf16-valued).
    pad_ref[0] = h.astype(pad_ref.dtype)

    # Per-batch time-sum of this block via a selection matmul on the MXU
    # (no in-kernel reshape / cross-sublane reduction).
    acc_ref[...] += jnp.dot(sel_ref[...], h,
                            preferred_element_type=jnp.float32)   # (B, H)

    @pl.when(k == pl.num_programs(0) - 1)
    def _():
        # transform (nn.Linear) matmul on the raw time-sum; the 1/count mean
        # scale and the bias are applied in the wrapper (they commute).
        fs_ref[...] = jnp.dot(acc_ref[...], wt_ref[...],
                              preferred_element_type=jnp.float32)


def _pick_time_block(t_padded, batch, max_rows):
    """Largest divisor Tt of t_padded with Tt*batch <= max_rows (>= 1)."""
    best = 1
    for tt in range(1, t_padded + 1):
        if t_padded % tt == 0 and tt * batch <= max_rows:
            best = tt
    return best


# ---------------------------------------------------------------------------
# Wrapper (glue: id padding, projection-table fold, count, bias, tan, permute)
# ---------------------------------------------------------------------------
def encoder_forward(data, params, max_block_rows=1024):
    T, B = data.shape
    embed_tbl = params["embed"]          # (V, E) f32, padding_idx row is zero
    wp = params["wp"]                    # (E, H) gn-stub projection
    wt = params["wt"]                    # (H, L*H)  == nn.Linear weight .T
    bt = params["bt"]                    # (1, L*H)  bias
    L = params["n_layers"]
    pad_idx = params["pad_idx"]
    V, E = embed_tbl.shape
    H = wp.shape[1]
    LH = wt.shape[1]

    # Fold embedding table and projection once (tiny (V,E)@(E,H) in XLA).
    # The padding row stays exactly zero, so pad tokens contribute nothing.
    projtab = (embed_tbl @ wp).astype(jnp.bfloat16)               # (V, H)

    # Time-pad the *token ids* with pad_idx instead of zero-filling output
    # rows: boundary rows fall out of the same gather path as exact zeros, so
    # the kernel only ever does full, unmasked block stores.
    Tp = T + 2
    ids_p = jnp.pad(data.astype(jnp.int32), ((1, 1), (0, 0)),
                    constant_values=pad_idx)                      # (Tp, B)

    # Time-block grid; Tt divides Tp exactly so there are no partial blocks.
    Tt = _pick_time_block(Tp, B, max_block_rows)
    kp = Tp // Tt
    rows = Tt * B
    ids3d = ids_p.reshape(kp, rows, 1)                            # time-major rows

    # Resident 0/1 selection matrix: sel[b, t*B + b] = 1 (tiny, read once).
    sel = (jnp.arange(rows, dtype=jnp.int32)[None, :] % B
           == jnp.arange(B, dtype=jnp.int32)[:, None]).astype(jnp.float32)

    wt32 = wt.astype(jnp.float32)   # keep the (B,H) @ Wt epilogue in f32

    # Explicit VMEM budget (covers v5e 16 MiB scoped default .. v7x 64 MiB phys).
    stream_bytes = 2 * (rows * 4 + rows * H * 2)       # double-buffered ids + pad
    resident_bytes = (V * H * 2 + H * LH * 4 + B * rows * 4
                      + B * LH * 4 + B * H * 4)
    vmem_limit = int(min(max(2 * (stream_bytes + resident_bytes) + (1 << 20),
                             8 << 20), 48 << 20))

    cost = pl.CostEstimate(
        flops=2 * Tp * B * V * H + 2 * B * Tp * B * H + 2 * B * H * LH,
        transcendentals=0,
        bytes_accessed=(Tp * B * 4 + Tp * B * H * 2 + V * H * 2
                        + H * LH * 4 + B * rows * 4 + B * LH * 4),
    )

    pad3d, fs_raw = pl.pallas_call(
        encoder_fused_kernel,
        grid=(kp,),
        in_specs=[
            pl.BlockSpec((1, rows, 1), lambda k: (k, 0, 0)),      # ids (streamed)
            pl.BlockSpec((B, rows), lambda k: (0, 0)),            # sel (resident)
            pl.BlockSpec((V, H), lambda k: (0, 0)),               # projtab (resident)
            pl.BlockSpec((H, LH), lambda k: (0, 0)),              # wt (resident)
        ],
        out_specs=(
            pl.BlockSpec((1, rows, H), lambda k: (k, 0, 0)),      # padded internal
            pl.BlockSpec((B, LH), lambda k: (0, 0)),              # raw transform
        ),
        out_shape=(
            jax.ShapeDtypeStruct((kp, rows, H), jnp.bfloat16),
            jax.ShapeDtypeStruct((B, LH), jnp.float32),
        ),
        scratch_shapes=[pltpu.VMEM((B, H), jnp.float32)],
        compiler_params=pltpu.CompilerParams(
            dimension_semantics=("arbitrary",),                   # pool reduction axis
            vmem_limit_bytes=vmem_limit,
        ),
        cost_estimate=cost,
    )(ids3d, sel, projtab, wt32)

    # Free layout plumbing back to the module's 3D shapes (contiguous reshape).
    # Kept in bf16 (the largest HBM tensor); cast here if the consumer needs f32.
    flattened_internal = pad3d.reshape(Tp, B, H)

    # Mean-pool denominator (tiny), bias, tan, view/permute — glue in XLA.
    count = jnp.sum(data != pad_idx, axis=0).astype(jnp.float32)  # (B,)
    inv = (1.0 / jnp.maximum(count, 1.0))[:, None]                # (B, 1)
    fs_lin = inv * fs_raw + bt                                    # (B, L*H)
    fs = jnp.tan(fs_lin.reshape(B, L, H)).transpose(1, 0, 2)      # (L, B, H)
    final_state_out = (fs, jnp.zeros_like(fs))
    return flattened_internal, final_state_out


if __name__ == "__main__":
    # Small deterministic setup
    V, E, H, L = 11, 16, 32, 2          # vocab, n_embed, n_hidden, n_layers
    T, B = 8, 2                          # seq len, batch
    pad_idx = 0

    key = jax.random.PRNGKey(0)
    k1, k2, k3, k4, k5 = jax.random.split(key, 5)
    embed_tbl = jax.random.normal(k1, (V, E), jnp.float32) * 0.1
    embed_tbl = embed_tbl.at[pad_idx].set(0.0)                 # padding_idx row
    wp = jax.random.normal(k2, (E, H), jnp.float32) * 0.1      # gn-stub proj
    wt = jax.random.normal(k3, (H, L * H), jnp.float32) * 0.1  # Linear weight.T
    bt = jax.random.normal(k4, (1, L * H), jnp.float32) * 0.1  # Linear bias

    data = jax.random.randint(k5, (T, B), 1, V).astype(jnp.int32)
    data = data.at[T - 2:, 0].set(pad_idx)                     # some padding

    params = {"embed": embed_tbl, "wp": wp, "wt": wt, "bt": bt,
              "n_layers": L, "pad_idx": pad_idx}

    # max_block_rows=8 forces a multi-step time grid at demo scale so the
    # accumulator / pl.when init-finalize path is actually exercised.
    flattened_internal, (h0, c0) = encoder_forward(data, params, max_block_rows=8)
    jax.block_until_ready((flattened_internal, h0, c0))

    # Shape / contract checks
    assert flattened_internal.shape == (T + 2, B, H)
    assert h0.shape == (L, B, H) and c0.shape == (L, B, H)
    assert bool(jnp.all(c0 == 0.0))
    assert bool(jnp.all(flattened_internal[0] == 0.0))
    assert bool(jnp.all(flattened_internal[-1] == 0.0))

    # Loose numerical check against a pure-JAX f32 reference (kernel uses a
    # bf16 projection table with f32 accumulation, bf16 padded output).
    emb_ref = jnp.take(embed_tbl, data, axis=0)                        # (T,B,E)
    mask_ref = (data != pad_idx).astype(jnp.float32)[..., None]        # (T,B,1)
    h_ref = jnp.einsum("tbe,eh->tbh", emb_ref, wp) * mask_ref
    pad_full_ref = jnp.pad(h_ref, ((1, 1), (0, 0), (0, 0)))
    pooled_ref = jnp.sum(h_ref, axis=0) / jnp.maximum(jnp.sum(mask_ref, axis=0), 1.0)
    fs_ref = jnp.tan((pooled_ref @ wt + bt).reshape(B, L, H)).transpose(1, 0, 2)
    assert bool(jnp.allclose(flattened_internal.astype(jnp.float32),
                             pad_full_ref, atol=1e-2, rtol=1e-2))
    assert bool(jnp.allclose(h0, fs_ref, atol=1e-2, rtol=1e-2))

    print("KERNEL_OK")
</pallas_src>

<mosaic_0001>
module attributes {stable_mosaic.version = 11 : i64} {
  func.func @encoder_fused_kernel(%arg0: i32, %arg1: memref<1x4x1xi32, #tpu.memory_space<vmem>>, %arg2: memref<2x4xf32, #tpu.memory_space<vmem>>, %arg3: memref<11x32xbf16, #tpu.memory_space<vmem>>, %arg4: memref<32x64xf32, #tpu.memory_space<vmem>>, %arg5: memref<1x4x32xbf16, #tpu.memory_space<vmem>>, %arg6: memref<2x64xf32, #tpu.memory_space<vmem>>, %arg7: memref<2x32xf32, #tpu.memory_space<vmem>>) attributes {dimension_semantics = [#tpu.dimension_semantics<arbitrary>], iteration_bounds = array<i64: 5>, scalar_prefetch = 0 : i64, scratch_operands = 1 : i64, tpu.core_type = #tpu.core_type<tc>, window_params = [{transform_indices = @transform_0, window_bounds = array<i64: 1, 4, 1>}, {pipeline_mode = #tpu.pipeline_mode<synchronous>, transform_indices = @transform_1, window_bounds = array<i64: 2, 4>}, {pipeline_mode = #tpu.pipeline_mode<synchronous>, transform_indices = @transform_2, window_bounds = array<i64: 11, 32>}, {pipeline_mode = #tpu.pipeline_mode<synchronous>, transform_indices = @transform_3, window_bounds = array<i64: 32, 64>}, {transform_indices = @transform_4, window_bounds = array<i64: 1, 4, 32>}, {pipeline_mode = #tpu.pipeline_mode<synchronous>, transform_indices = @transform_5, window_bounds = array<i64: 2, 64>}]} {
    %c0_i32 = arith.constant 0 : i32
    %0 = arith.cmpi eq, %arg0, %c0_i32 : i32
    %1 = arith.extui %0 : i1 to i32
    %c0_i32_0 = arith.constant 0 : i32
    %2 = arith.cmpi ne, %1, %c0_i32_0 : i32
    scf.if %2 {
      %cst_16 = arith.constant 0.000000e+00 : f32
      %25 = vector.broadcast %cst_16 : f32 to vector<2x32xf32>
      %c0_17 = arith.constant 0 : index
      %c0_18 = arith.constant 0 : index
      %26 = vector.load %arg7[%c0_17, %c0_18] : memref<2x32xf32, #tpu.memory_space<vmem>>, vector<2x32xf32>
      tpu.vector_store %arg7[%c0_17, %c0_18], %25 {strides = array<i32>} : memref<2x32xf32, #tpu.memory_space<vmem>>, vector<2x32xf32>,
    } else {
    }
    %c0 = arith.constant 0 : index
    %c0_1 = arith.constant 0 : index
    %c0_2 = arith.constant 0 : index
    %3 = vector.load %arg1[%c0, %c0_1, %c0_2] : memref<1x4x1xi32, #tpu.memory_space<vmem>>, vector<1x4x1xi32>
    %4 = vector.shape_cast %3 : vector<1x4x1xi32> to vector<4x1xi32>
    %5 = tpu.iota {dimensions = array<i32: 1>} : vector<4x11xi32>
    %6 = vector.broadcast %4 : vector<4x1xi32> to vector<4x11xi32>
    %7 = arith.cmpi eq, %6, %5 : vector<4x11xi32>
    %8 = arith.extui %7 : vector<4x11xi1> to vector<4x11xi32>
    %9 = arith.sitofp %8 : vector<4x11xi32> to vector<4x11xf32>
    %10 = arith.truncf %9 : vector<4x11xf32> to vector<4x11xbf16>
    %c0_3 = arith.constant 0 : index
    %c0_4 = arith.constant 0 : index
    %11 = vector.load %arg3[%c0_3, %c0_4] : memref<11x32xbf16, #tpu.memory_space<vmem>>, vector<11x32xbf16>
    %cst = arith.constant dense<0.000000e+00> : vector<4x32xf32>
    %12 = tpu.matmul %10, %11, %cst {dimension_numbers = #tpu.dot_dimension_numbers<[1], [0], [0], [1], [0, 0, 1, 1], [], []>} : vector<4x11xbf16>, vector<11x32xbf16>, vector<4x32xf32> -> vector<4x32xf32>
    %13 = arith.truncf %12 : vector<4x32xf32> to vector<4x32xbf16>
    %c0_5 = arith.constant 0 : index
    %c0_6 = arith.constant 0 : index
    %c0_7 = arith.constant 0 : index
    %14 = vector.load %arg5[%c0_5, %c0_6, %c0_7] : memref<1x4x32xbf16, #tpu.memory_space<vmem>>, vector<1x4x32xbf16>
    %15 = vector.shape_cast %14 : vector<1x4x32xbf16> to vector<4x32xbf16>
    %16 = vector.shape_cast %13 : vector<4x32xbf16> to vector<1x4x32xbf16>
    tpu.vector_store %arg5[%c0_5, %c0_6, %c0_7], %16 {strides = array<i32>} : memref<1x4x32xbf16, #tpu.memory_space<vmem>>, vector<1x4x32xbf16>,
    %c0_8 = arith.constant 0 : index
    %c0_9 = arith.constant 0 : index
    %17 = vector.load %arg7[%c0_8, %c0_9] : memref<2x32xf32, #tpu.memory_space<vmem>>, vector<2x32xf32>
    %c0_10 = arith.constant 0 : index
    %c0_11 = arith.constant 0 : index
    %18 = vector.load %arg2[%c0_10, %c0_11] : memref<2x4xf32, #tpu.memory_space<vmem>>, vector<2x4xf32>
    %cst_12 = arith.constant dense<0.000000e+00> : vector<2x32xf32>
    %19 = tpu.matmul %18, %12, %cst_12 {dimension_numbers = #tpu.dot_dimension_numbers<[1], [0], [0], [1], [0, 0, 1, 1], [], []>} : vector<2x4xf32>, vector<4x32xf32>, vector<2x32xf32> -> vector<2x32xf32>
    %20 = arith.addf %17, %19 : vector<2x32xf32>
    %c0_13 = arith.constant 0 : index
    %c0_14 = arith.constant 0 : index
    %21 = vector.load %arg7[%c0_13, %c0_14] : memref<2x32xf32, #tpu.memory_space<vmem>>, vector<2x32xf32>
    tpu.vector_store %arg7[%c0_13, %c0_14], %20 {strides = array<i32>} : memref<2x32xf32, #tpu.memory_space<vmem>>, vector<2x32xf32>,
    %c4_i32 = arith.constant 4 : i32
    %22 = arith.cmpi eq, %arg0, %c4_i32 : i32
    %23 = arith.extui %22 : i1 to i32
    %c0_i32_15 = arith.constant 0 : i32
    %24 = arith.cmpi ne, %23, %c0_i32_15 : i32
    scf.if %24 {
      %c0_16 = arith.constant 0 : index
      %c0_17 = arith.constant 0 : index
      %25 = vector.load %arg7[%c0_16, %c0_17] : memref<2x32xf32, #tpu.memory_space<vmem>>, vector<2x32xf32>
      %c0_18 = arith.constant 0 : index
      %c0_19 = arith.constant 0 : index
      %26 = vector.load %arg4[%c0_18, %c0_19] : memref<32x64xf32, #tpu.memory_space<vmem>>, vector<32x64xf32>
      %cst_20 = arith.constant dense<0.000000e+00> : vector<2x64xf32>
      %27 = tpu.matmul %25, %26, %cst_20 {dimension_numbers = #tpu.dot_dimension_numbers<[1], [0], [0], [1], [0, 0, 1, 1], [], []>} : vector<2x32xf32>, vector<32x64xf32>, vector<2x64xf32> -> vector<2x64xf32>
      %c0_21 = arith.constant 0 : index
      %c0_22 = arith.constant 0 : index
      %28 = vector.load %arg6[%c0_21, %c0_22] : memref<2x64xf32, #tpu.memory_space<vmem>>, vector<2x64xf32>
      tpu.vector_store %arg6[%c0_21, %c0_22], %27 {strides = array<i32>} : memref<2x64xf32, #tpu.memory_space<vmem>>, vector<2x64xf32>,
    } else {
    }
    return
  }
  func.func @transform_0(%arg0: i32) -> (i32, i32, i32) {
    %c0_i32 = arith.constant 0 : i32
    %c0_i32_0 = arith.constant 0 : i32
    %c0_i32_1 = arith.constant 0 : i32
    return %arg0, %c0_i32, %c0_i32_0 : i32, i32, i32
  }
  func.func @transform_1(%arg0: i32) -> (i32, i32) {
    %c0_i32 = arith.constant 0 : i32
    %c0_i32_0 = arith.constant 0 : i32
    %c0_i32_1 = arith.constant 0 : i32
    return %c0_i32, %c0_i32_0 : i32, i32
  }
  func.func @transform_2(%arg0: i32) -> (i32, i32) {
    %c0_i32 = arith.constant 0 : i32
    %c0_i32_0 = arith.constant 0 : i32
    %c0_i32_1 = arith.constant 0 : i32
    return %c0_i32, %c0_i32_0 : i32, i32
  }
  func.func @transform_3(%arg0: i32) -> (i32, i32) {
    %c0_i32 = arith.constant 0 : i32
    %c0_i32_0 = arith.constant 0 : i32
    %c0_i32_1 = arith.constant 0 : i32
    return %c0_i32, %c0_i32_0 : i32, i32
  }
  func.func @transform_4(%arg0: i32) -> (i32, i32, i32) {
    %c0_i32 = arith.constant 0 : i32
    %c0_i32_0 = arith.constant 0 : i32
    %c0_i32_1 = arith.constant 0 : i32
    return %arg0, %c0_i32, %c0_i32_0 : i32, i32, i32
  }
  func.func @transform_5(%arg0: i32) -> (i32, i32) {
    %c0_i32 = arith.constant 0 : i32
    %c0_i32_0 = arith.constant 0 : i32
    %c0_i32_1 = arith.constant 0 : i32
    return %c0_i32, %c0_i32_0 : i32, i32
  }
}

</mosaic_0001>

<llo_original>
// kernel: tpu_custom_call.1
$region0: #{tpu_custom_call.1}
  #allocation0 [shape = 'u32[]', space=smem, size = 0x4, offset = 0x4, fixed_abs, tag = 'smem constant byte address 0x4 - core index']
  #allocation1 [shape = 'u32[72,128]{1,0:T(1,128)}', space=vmem, size = 0x9000, scoped, tag = 'internal scratch']
  #allocation2 [shape = 'f32[2,32]{1,0:T(2,128)}', space=vmem, size = 0x400, scoped, tag = 'scratch operand']
  %s0 = inlined_call_operand.vmem [shape: s32[5,4,1], index: 0, kind: input, shape index: {}]
  %s1 = inlined_call_operand.vmem [shape: f32[2,4], index: 1, kind: input, shape index: {}]
  %s2 = inlined_call_operand.vmem [shape: bf16[11,32], index: 2, kind: input, shape index: {}]
  %s3 = inlined_call_operand.hbm [shape: f32[32,64], index: 3, kind: input, shape index: {}]
  %s4 = inlined_call_operand.hbm [shape: bf16[5,4,32], index: 4, kind: output, shape index: {0}]
  %s5 = inlined_call_operand.hbm [shape: f32[2,64], index: 5, kind: output, shape index: {1}]
  %6 = xla_tuple %s4, %s5
  %s7 = sld [smem:[#allocation0]]
  $region69: #{tpu_custom_call.1} parent=0
    _
  %s9 = ssub.s32 1, %s7
  %s10 = scalar_select 0, %s9, %s7
  $region1: #{tpu_custom_call.1} parent=0
    #allocation3 [shape = 'u8[16384]{0}', space=vmem, size = 0x4000, scoped, tag = 'input window, operand 3, single buffered']
    #allocation4 [shape = 's32[2]{0}', space=sflag, size = 0x8, scoped, tag = 'scoped memory for tpu_custom_call.1']
    #allocation5 [shape = 's32[2]{0}', space=sflag, size = 0x8, scoped, tag = 'scoped memory for tpu_custom_call.1']
    #allocation6 [shape = 'u8[2048]{0}', space=vmem, size = 0x800, scoped, tag = 'output window, operand 0']
    #allocation7 [shape = 'u8[1024]{0}', space=vmem, size = 0x400, scoped, tag = 'output window, operand 1, single buffered']
    #allocation8 [shape = 's32[1]{0}', space=sflag, size = 0x4, scoped, tag = 'scoped memory for tpu_custom_call.1']
    %11 = vsyncpa [#allocation4], 0
    %12 = vsyncpa [#allocation5], 0
    %s13 = scalar_lea.sflag [#allocation5], 1
    %14 = vsyncpa %s13, 0
    %15 = vsyncpa [#allocation8], 0
    loop: start=0, step=1, limit=7
    $region2: #{tpu_custom_call.1} parent=1 // loop_pre_header
      _
    $region3: #{tpu_custom_call.1} parent=1 // loop_header
      %s17 = sphi 0, %s21
      %p18 = scmp.ge.s32.totalorder %s17, 7
      %s27 = sphi 0, %s29
      %s30 = sphi 0, %s27
      %s31 = sphi 0, %s30
      %s47 = sphi 0, %s31
      %s51 = sphi 0, %s51
      %s53 = sphi 0, %s51
      %s54 = sphi 0, %s53
      %s68 = sphi 0, %s54
      %s72 = sphi 0, %s72
      %s74 = sphi 0, %s72
      %s75 = sphi 0, %s74
      %s89 = sphi 0, %s75
      %s93 = sphi 0, %s93
      %s95 = sphi 0, %s93
      %s96 = sphi 0, %s95
      %s110 = sphi 0, %s96
      %s116 = sphi 0, %s118
      %s119 = sphi 0, %s116
      %s120 = sphi 0, %s119
      %s136 = sphi 0, %s120
      %s140 = sphi 0, %s140
      %s142 = sphi 0, %s140
      %s143 = sphi 0, %s142
      %s157 = sphi 0, %s143
    $region4: #{tpu_custom_call.1} parent=1 // loop_header_branch
      %20 = sbr.rel (%p18) target = $region8
    $region5: #{tpu_custom_call.1} parent=1 // loop_body
      %s22 = ssub.s32 %s17, 1
      %s23 = ssub.s32 %s17, 2
      %s24 = sadd.s32 %s17, 1
      %s25 = ssub.s32 %s17, %s24
      %p26 = scmp.eq.s32.totalorder %s25, 0
      %s28 = sadd.s32 %s27, 1
      %s29 = scalar_select %p26, %s27, %s28
      %p32 = pneg %p26
      %p33 = scmp.eq.s32.totalorder %s17, 4
      %p34 = por %p32, %p33
      %p35 = scmp.ne.s32.totalorder %s27, %s30
      %p36 = scmp.eq.s32.totalorder %s17, 0
      %p37 = por %p35, %p36
      %p38 = scmp.ne.s32.totalorder %s27, %s30
      %p39 = scmp.eq.s32.totalorder %s22, 4
      %p40 = por %p38, %p39
      %p41 = scmp.ne.s32.totalorder %s30, %s31
      %p42 = scmp.eq.s32.totalorder %s22, 0
      %p43 = por %p41, %p42
      %p44 = scmp.ne.s32.totalorder %s30, %s31
      %p45 = scmp.eq.s32.totalorder %s23, 4
      %p46 = por %p44, %p45
      %p48 = scmp.ne.s32.totalorder %s31, %s47
      %p49 = scmp.eq.s32.totalorder %s23, 0
      %p50 = por %p48, %p49
      %s52 = sadd.s32 %s51, 1
      %p55 = scmp.eq.s32.totalorder %s17, 4
      %p56 = scmp.ne.s32.totalorder %s51, %s53
      %p57 = scmp.eq.s32.totalorder %s17, 0
      %p58 = por %p56, %p57
      %p59 = scmp.ne.s32.totalorder %s51, %s53
      %p60 = scmp.eq.s32.totalorder %s22, 4
      %p61 = por %p59, %p60
      %p62 = scmp.ne.s32.totalorder %s53, %s54
      %p63 = scmp.eq.s32.totalorder %s22, 0
      %p64 = por %p62, %p63
      %p65 = scmp.ne.s32.totalorder %s53, %s54
      %p66 = scmp.eq.s32.totalorder %s23, 4
      %p67 = por %p65, %p66
      %p69 = scmp.ne.s32.totalorder %s54, %s68
      %p70 = scmp.eq.s32.totalorder %s23, 0
      %p71 = por %p69, %p70
      %s73 = sadd.s32 %s72, 1
      %p76 = scmp.eq.s32.totalorder %s17, 4
      %p77 = scmp.ne.s32.totalorder %s72, %s74
      %p78 = scmp.eq.s32.totalorder %s17, 0
      %p79 = por %p77, %p78
      %p80 = scmp.ne.s32.totalorder %s72, %s74
      %p81 = scmp.eq.s32.totalorder %s22, 4
      %p82 = por %p80, %p81
      %p83 = scmp.ne.s32.totalorder %s74, %s75
      %p84 = scmp.eq.s32.totalorder %s22, 0
      %p85 = por %p83, %p84
      %p86 = scmp.ne.s32.totalorder %s74, %s75
      %p87 = scmp.eq.s32.totalorder %s23, 4
      %p88 = por %p86, %p87
      %p90 = scmp.ne.s32.totalorder %s75, %s89
      %p91 = scmp.eq.s32.totalorder %s23, 0
      %p92 = por %p90, %p91
      %s94 = sadd.s32 %s93, 1
      %p97 = scmp.eq.s32.totalorder %s17, 4
      %p98 = scmp.ne.s32.totalorder %s93, %s95
      %p99 = scmp.eq.s32.totalorder %s17, 0
      %p100 = por %p98, %p99
      %p101 = scmp.ne.s32.totalorder %s93, %s95
      %p102 = scmp.eq.s32.totalorder %s22, 4
      %p103 = por %p101, %p102
      %p104 = scmp.ne.s32.totalorder %s95, %s96
      %p105 = scmp.eq.s32.totalorder %s22, 0
      %p106 = por %p104, %p105
      %p107 = scmp.ne.s32.totalorder %s95, %s96
      %p108 = scmp.eq.s32.totalorder %s23, 4
      %p109 = por %p107, %p108
      %p111 = scmp.ne.s32.totalorder %s96, %s110
      %p112 = scmp.eq.s32.totalorder %s23, 0
      %p113 = por %p111, %p112
      %s114 = ssub.s32 %s17, %s24
      %p115 = scmp.eq.s32.totalorder %s114, 0
      %s117 = sadd.s32 %s116, 1
      %s118 = scalar_select %p115, %s116, %s117
      %p121 = pneg %p115
      %p122 = scmp.eq.s32.totalorder %s17, 4
      %p123 = por %p121, %p122
      %p124 = scmp.ne.s32.totalorder %s116, %s119
      %p125 = scmp.eq.s32.totalorder %s17, 0
      %p126 = por %p124, %p125
      %p127 = scmp.ne.s32.totalorder %s116, %s119
      %p128 = scmp.eq.s32.totalorder %s22, 4
      %p129 = por %p127, %p128
      %p130 = scmp.ne.s32.totalorder %s119, %s120
      %p131 = scmp.eq.s32.totalorder %s22, 0
      %p132 = por %p130, %p131
      %p133 = scmp.ne.s32.totalorder %s119, %s120
      %p134 = scmp.eq.s32.totalorder %s23, 4
      %p135 = por %p133, %p134
      %p137 = scmp.ne.s32.totalorder %s120, %s136
      %p138 = scmp.eq.s32.totalorder %s23, 0
      %p139 = por %p137, %p138
      %s141 = sadd.s32 %s140, 1
      %p144 = scmp.eq.s32.totalorder %s17, 4
      %p145 = scmp.ne.s32.totalorder %s140, %s142
      %p146 = scmp.eq.s32.totalorder %s17, 0
      %p147 = por %p145, %p146
      %p148 = scmp.ne.s32.totalorder %s140, %s142
      %p149 = scmp.eq.s32.totalorder %s22, 4
      %p150 = por %p148, %p149
      %p151 = scmp.ne.s32.totalorder %s142, %s143
      %p152 = scmp.eq.s32.totalorder %s22, 0
      %p153 = por %p151, %p152
      %p154 = scmp.ne.s32.totalorder %s142, %s143
      %p155 = scmp.eq.s32.totalorder %s23, 4
      %p156 = por %p154, %p155
      %p158 = scmp.ne.s32.totalorder %s143, %s157
      %p159 = scmp.eq.s32.totalorder %s23, 0
      %p160 = por %p158, %p159
      %p161 = scmp.le.s32.totalorder 1, %s17
      %p162 = scmp.lt.s32.totalorder %s17, 6
      %p163 = pnand %p161, %p162
      %p164 = pneg %p163
      // Predicated region
      $region9: #{tpu_custom_call.1} parent=5 // pred_check
        _
      $region10: #{tpu_custom_call.1} parent=5 // pred_check_branch
        %166 = sbr.rel (%p163) target = $region12
      $region11: #{tpu_custom_call.1} parent=5 // pred_region
        %s167 = ssub.s32 %s17, 1
        // Predicated region
        $region13: #{tpu_custom_call.1} parent=11 // pred_check
          %p168 = pneg %p64
        $region14: #{tpu_custom_call.1} parent=11 // pred_check_branch
          %170 = sbr.rel (%p168) target = $region16
        $region15: #{tpu_custom_call.1} parent=11 // pred_region
          _
        $region16: #{tpu_custom_call.1} parent=11 // pred_fallthru
          _
        // Predicated region
        $region17: #{tpu_custom_call.1} parent=11 // pred_check
          %p171 = pneg %p85
        $region18: #{tpu_custom_call.1} parent=11 // pred_check_branch
          %173 = sbr.rel (%p171) target = $region20
        $region19: #{tpu_custom_call.1} parent=11 // pred_region
          _
        $region20: #{tpu_custom_call.1} parent=11 // pred_fallthru
          _
        // Predicated region
        $region21: #{tpu_custom_call.1} parent=11 // pred_check
          %p174 = pneg %p106
        $region22: #{tpu_custom_call.1} parent=11 // pred_check_branch
          %176 = sbr.rel (%p174) target = $region24
        $region23: #{tpu_custom_call.1} parent=11 // pred_region
          %178 = vsyncadd [#allocation4], 0
          %s179 = sshll.u32 %s3, 4
          %s180 = int_to_ptr.hbm [resolvable:$true] %s179
          %s181 = sshll.u32 [#allocation3], 4
          %s182 = int_to_ptr.vmem [resolvable:$true] %s181
          %187 = dma.hbm_to_vmem [thread:$0]  %s180, 512, %s182, [#allocation4], 128, 128, 8
        $region24: #{tpu_custom_call.1} parent=11 // pred_fallthru
          _
      $region12: #{tpu_custom_call.1} parent=5 // pred_fallthru
        _
      %p188 = scmp.lt.s32.totalorder %s17, 5
      // Predicated region
      $region25: #{tpu_custom_call.1} parent=5 // pred_check
        %p189 = pneg %p188
      $region26: #{tpu_custom_call.1} parent=5 // pred_check_branch
        %191 = sbr.rel (%p189) target = $region28
      $region27: #{tpu_custom_call.1} parent=5 // pred_region
        // Predicated region
        $region29: #{tpu_custom_call.1} parent=27 // pred_check
          %p192 = pneg %p37
        $region30: #{tpu_custom_call.1} parent=27 // pred_check_branch
          %194 = sbr.rel (%p192) target = $region32
        $region31: #{tpu_custom_call.1} parent=27 // pred_region
          %p195 = scmp.lt.s32.totalorder %s17, 4
          %s196 = scalar_select %p195, %s17, 4
          %s197 = smul.addr %s196, 4
          %s198 = scalar_lea.vmem %s0, %s197
        $region32: #{tpu_custom_call.1} parent=27 // pred_fallthru
          _
      $region28: #{tpu_custom_call.1} parent=5 // pred_fallthru
        _
      %p199 = scmp.le.s32.totalorder 1, %s17
      %p200 = scmp.lt.s32.totalorder %s17, 6
      %p201 = pnand %p199, %p200
      %p202 = pneg %p201
      // Predicated region
      $region33: #{tpu_custom_call.1} parent=5 // pred_check
        _
      $region34: #{tpu_custom_call.1} parent=5 // pred_check_branch
        %204 = sbr.rel (%p201) target = $region36
      $region35: #{tpu_custom_call.1} parent=5 // pred_region
        %s205 = ssub.s32 %s17, 1
        // Predicated region
        $region37: #{tpu_custom_call.1} parent=35 // pred_check
          %p206 = pneg %p106
        $region38: #{tpu_custom_call.1} parent=35 // pred_check_branch
          %208 = sbr.rel (%p206) target = $region40
        $region39: #{tpu_custom_call.1} parent=35 // pred_region
          %210 = dma.done [#allocation4], 512
        $region40: #{tpu_custom_call.1} parent=35 // pred_fallthru
          _
        %p211 = scmp.lt.s32.totalorder %s22, 4
        %s212 = scalar_select %p211, %s22, 4
        %s213 = smul.addr %s212, 4
        %s214 = scalar_lea.vmem %s0, %s213
        %p215 = pneg %p43
        %p216 = pneg %p40
        %p217 = pneg %p64
        %p218 = pneg %p61
        %p219 = pneg %p85
        %p220 = pneg %p82
        %p221 = pneg %p106
        %p222 = pneg %p103
        %p223 = pneg %p132
        %p224 = pneg %p129
        %s225 = sand.u32 %s119, 1
        %s226 = scalar_lea.sflag [#allocation5], %s225
        %s227 = sand.u32 %s119, 1
        %s228 = smul.addr %s227, 2
        %s229 = scalar_lea.vmem [#allocation6], %s228
        %p230 = pneg %p153
        %p231 = pneg %p150
        %p232 = scmp.lt.s32.totalorder %s22, 4
        %s233 = scalar_select %p232, %s22, 4
        %s234 = smul.addr %s233, 4
        %s235 = scalar_lea.vmem %s0, %s234
        %p237 = scmp.eq.s32.totalorder %s22, 0
        // Predicated region
        $region41: #{tpu_custom_call.1} parent=35 // pred_check
          %p238 = pneg %p237
        $region42: #{tpu_custom_call.1} parent=35 // pred_check_branch
          %240 = sbr.rel (%p238) target = $region44
        $region43: #{tpu_custom_call.1} parent=35 // pred_region
          %vm241 = vcmask 254976
          %242 = vst.msk [vmem:[#allocation2] sm:$0x3] %vm241, 0.0
        $region44: #{tpu_custom_call.1} parent=35 // pred_fallthru
          _
        %v243 = vld [vmem:[%s235] sm:$0xf]
        %v244 = vlaneseq
        %v245 = vand.u32 %v244, 127
        %246 = vset.pattern.permute.xlu0 0
        %247 = vperm.xlu0 %246, %v243
        %v248 = vpop.permute.xlu0 %247
        %vm249 = vcmp.eq.s32.totalorder %v248, %v245
        %v250 = vsel %vm249, 1, 0
        %v251 = vcvt.s32.f32 %v250
        %v252 = vpack.c.bf16 %v251, %v251
        %v253 = vld [vmem:[%s2] sm:$0xf]
        %v254 = vld [vmem:[%s2 + $0x4] sm:$0x3]
        %v257 = vunpack.c.l.b16 %v253
        %v258 = vunpack.c.l.b16 %v254
        %v259 = vpack.c.b16 %v258, %v257
        %vm260 = vcmask 89088
        %v262 = vsel %vm260, %v252, 0
        %vm264 = vcmask 1044480
        %vm265 = vcmask 1045504
        %v266 = vsel %vm264, 4294967295, 65535
        %v267 = vsel %vm265, %v266, 0
        %v269 = vand.u32 %v259, %v267
        %271 = vmatpush.bf16.msra.mxu0 0
        %272 = vmatpush.bf16.msra.mxu0 0
        %273 = vmatpush.bf16.msra.mxu0 0
        %274 = vmatpush.bf16.msra.mxu0 0
        %275 = vmatpush.bf16.msra.mxu0 0
        %276 = vmatpush.bf16.msra.mxu0 0
        %277 = vmatpush.bf16.msra.mxu0 0
        %278 = vmatpush.bf16.msra.mxu0 %v269
        %279 = vmatmul.bf16.gmra.mxu0 %v262
        %v280 = vpop.f32.mrf.mxu0
        %v281 = vadd.f32 0.0, %v280
        %v282 = vpop.f32.mrf.mxu0
        %283 = vdwg.mxu0
        %v284 = vpack.c.bf16 %v281, %v281
        %vm285 = vcmask 254976
        %286 = vst.msk [vmem:[%s229] sm:$0x3] %vm285, %v284
        %v287 = vld [vmem:[#allocation2] sm:$0x3]
        %v288 = vld [vmem:[%s1] sm:$0x3]
        %vm289 = vcmask 31744
        %v291 = vsel %vm289, %v288, 0
        %vm293 = vcmask 1043456
        %v295 = vsel %vm293, %v281, 0
        %297 = vmatpush.msra.mxu0 0.0
        %298 = vmatpush.msra.mxu0 0.0
        %299 = vmatpush.msra.mxu0 0.0
        %300 = vmatpush.msra.mxu0 0.0
        %301 = vmatpush.msra.mxu0 0.0
        %302 = vmatpush.msra.mxu0 0.0
        %303 = vmatpush.msra.mxu0 0.0
        %304 = vmatpush.msra.mxu0 0.0
        %305 = vmatpush.msra.mxu0 0.0
        %306 = vmatpush.msra.mxu0 0.0
        %307 = vmatpush.msra.mxu0 0.0
        %308 = vmatpush.msra.mxu0 0.0
        %309 = vmatpush.msra.mxu0 0.0
        %310 = vmatpush.msra.mxu0 0.0
        %311 = vmatpush.msra.mxu0 0.0
        %312 = vmatpush.msra.mxu0 %v295
        %313 = vmatmul.f32.gmra.mxu0 %v291
        %v314 = vpop.f32.mrf.mxu0
        %v315 = vadd.f32 0.0, %v314
        %316 = vdwg.mxu0
        %v317 = vadd.f32 %v287, %v315
        %318 = vst.msk [vmem:[#allocation2] sm:$0x3] %vm285, %v317
        %p319 = scmp.eq.s32.totalorder %s22, 4
        // Predicated region
        $region45: #{tpu_custom_call.1} parent=35 // pred_check
          %p320 = pneg %p319
        $region46: #{tpu_custom_call.1} parent=35 // pred_check_branch
          %322 = sbr.rel (%p320) target = $region48
        $region47: #{tpu_custom_call.1} parent=35 // pred_region
          %v323 = vld [vmem:[#allocation2] sm:$0x3]
          %v324 = vld [vmem:[#allocation3] sm:$0xff]
          %v325 = vld [vmem:[#allocation3 + $0x8] sm:$0xff]
          %v326 = vld [vmem:[#allocation3 + $0x10] sm:$0xff]
          %v327 = vld [vmem:[#allocation3 + $0x18] sm:$0xff]
          %vm328 = vcmask 261120
          %v330 = vsel %vm328, %v323, 0
          %332 = vmatpush.msra.mxu0 0.0
          %333 = vmatpush.msra.mxu0 0.0
          %334 = vmatpush.msra.mxu0 0.0
          %335 = vmatpush.msra.mxu0 0.0
          %336 = vmatpush.msra.mxu0 0.0
          %337 = vmatpush.msra.mxu0 0.0
          %338 = vmatpush.msra.mxu0 0.0
          %339 = vmatpush.msra.mxu0 0.0
          %340 = vmatpush.msra.mxu0 0.0
          %341 = vmatpush.msra.mxu0 0.0
          %342 = vmatpush.msra.mxu0 0.0
          %343 = vmatpush.msra.mxu0 0.0
          %344 = vmatpush.msra.mxu0 %v327
          %345 = vmatpush.msra.mxu0 %v326
          %346 = vmatpush.msra.mxu0 %v325
          %347 = vmatpush.msra.mxu0 %v324
          %348 = vmatmul.f32.gmra.mxu0 %v330
          %v349 = vpop.f32.mrf.mxu0
          %v350 = vadd.f32 0.0, %v349
          %351 = vdwg.mxu0
          %vm352 = vcmask 517120
          %353 = vst.msk [vmem:[#allocation7] sm:$0x3] %vm352, %v350
        $region48: #{tpu_custom_call.1} parent=35 // pred_fallthru
          _
        %s354 = sand.u32 %s119, 1
        %s355 = scalar_lea.sflag [#allocation5], %s354
        %s356 = sand.u32 %s119, 1
        %s357 = smul.addr %s356, 2
        %s358 = scalar_lea.vmem [#allocation6], %s357
        // Predicated region
        $region49: #{tpu_custom_call.1} parent=35 // pred_check
          %p359 = pneg %p129
        $region50: #{tpu_custom_call.1} parent=35 // pred_check_branch
          %361 = sbr.rel (%p359) target = $region52
        $region51: #{tpu_custom_call.1} parent=35 // pred_region
          %363 = vsyncadd %s355, 0
          %s364 = smul.addr %s22, 2
          %s365 = scalar_lea.hbm %s4, %s364
          %s367 = sshll.u32 %s358, 4
          %s368 = int_to_ptr.vmem [resolvable:$true] %s367
          %s369 = sshll.u32 %s365, 4
          %s370 = int_to_ptr.hbm [resolvable:$true] %s369
          %372 = dma.vmem_to_hbm [thread:$0]  %s368, 32, %s370, %s355
        $region52: #{tpu_custom_call.1} parent=35 // pred_fallthru
          _
        // Predicated region
        $region53: #{tpu_custom_call.1} parent=35 // pred_check
          %p373 = pneg %p150
        $region54: #{tpu_custom_call.1} parent=35 // pred_check_branch
          %375 = sbr.rel (%p373) target = $region56
        $region55: #{tpu_custom_call.1} parent=35 // pred_region
          %377 = vsyncadd [#allocation8], 0
          %s379 = sshll.u32 [#allocation7], 4
          %s380 = int_to_ptr.vmem [resolvable:$true] %s379
          %s381 = sshll.u32 %s5, 4
          %s382 = int_to_ptr.hbm [resolvable:$true] %s381
          %384 = dma.vmem_to_hbm [thread:$0]  %s380, 32, %s382, [#allocation8]
        $region56: #{tpu_custom_call.1} parent=35 // pred_fallthru
          _
        // Predicated region
        $region57: #{tpu_custom_call.1} parent=35 // pred_check
          %p385 = pneg %p150
        $region58: #{tpu_custom_call.1} parent=35 // pred_check_branch
          %387 = sbr.rel (%p385) target = $region60
        $region59: #{tpu_custom_call.1} parent=35 // pred_region
          %389 = dma.done [#allocation8], 32
        $region60: #{tpu_custom_call.1} parent=35 // pred_fallthru
          _
      $region36: #{tpu_custom_call.1} parent=5 // pred_fallthru
        _
      %p390 = scmp.le.s32.totalorder 2, %s17
      // Predicated region
      $region61: #{tpu_custom_call.1} parent=5 // pred_check
        %p391 = pneg %p390
      $region62: #{tpu_custom_call.1} parent=5 // pred_check_branch
        %393 = sbr.rel (%p391) target = $region64
      $region63: #{tpu_custom_call.1} parent=5 // pred_region
        %s394 = ssub.s32 %s17, 2
        // Predicated region
        $region65: #{tpu_custom_call.1} parent=63 // pred_check
          %p395 = pneg %p135
        $region66: #{tpu_custom_call.1} parent=63 // pred_check_branch
          %397 = sbr.rel (%p395) target = $region68
        $region67: #{tpu_custom_call.1} parent=63 // pred_region
          %s398 = sand.u32 %s120, 1
          %s399 = scalar_lea.sflag [#allocation5], %s398
          %s400 = sand.u32 %s120, 1
          %s401 = smul.addr %s400, 2
          %s402 = scalar_lea.vmem [#allocation6], %s401
          %404 = dma.done %s399, 32
        $region68: #{tpu_custom_call.1} parent=63 // pred_fallthru
          _
      $region64: #{tpu_custom_call.1} parent=5 // pred_fallthru
        _
    $region6: #{tpu_custom_call.1} parent=1 // loop_footer
      %s21 = sadd.s32 1, %s17
    $region7: #{tpu_custom_call.1} parent=1 // loop_footer_branch
      %16 = sbr.rel target = $region3
    $region8: #{tpu_custom_call.1} parent=1 // loop_exit
      _
    %405 = vsyncpa [#allocation4], 1
    %s406 = scalar_lea.sflag [#allocation4], 1
    %407 = vsyncpa %s406, 1
    %408 = vsyncpa [#allocation5], 1
    %s409 = scalar_lea.sflag [#allocation5], 1
    %410 = vsyncpa %s409, 1
    %411 = vsyncpa [#allocation8], 1

</llo_original>
